<compile_context>
chip_gen: v7x
topology: tpu7x:2x2x1
jax: 0.10.0
libtpu: 0.0.40
codegen_flags: <defaults>
</compile_context>

<pallas_src>
import jax
import jax.numpy as jnp
from jax.experimental import pallas as pl
from jax.experimental.pallas import tpu as pltpu

K_ITERS = 10
ALPHA = 0.1
TILE_M = 128   # node row tile (sublane/MXU aligned)
LANE = 128     # lane width; feature dims padded to a multiple of this


def _round_up(v, m):
    return (v + m - 1) // m * m


def _appnp_kernel(x_ref, adj_ref, w1_ref, b1_ref, w2_ref, b2_ref,
                  out_ref, ah0_ref, hbuf_ref):
    k = pl.program_id(0)          # 0 = MLP step, 1..K_ITERS = propagation steps
    i = pl.program_id(1)          # node row-tile index
    tm = x_ref.shape[0]           # TILE_M
    n_pad = ah0_ref.shape[0]      # padded node count
    row0 = pl.multiple_of(i * tm, tm)

    @pl.when(k == 0)
    def _mlp():
        # lin1: Linear -> ReLU -> Linear (dropouts are p=0 => no-ops)
        h = jnp.dot(x_ref[...], w1_ref[...],
                    preferred_element_type=jnp.float32) + b1_ref[...]
        h = jnp.maximum(h, 0.0)
        h0 = jnp.dot(h, w2_ref[...],
                     preferred_element_type=jnp.float32) + b2_ref[...]
        # Seed ping-pong state (half 0) and cache the hoisted alpha*h0.
        hbuf_ref[pl.ds(row0, tm), :] = h0
        ah0_ref[pl.ds(row0, tm), :] = ALPHA * h0
        if K_ITERS == 0:  # static edge case: no propagation steps at all
            out_ref[pl.ds(row0, tm), :] = h0.astype(out_ref.dtype)

    @pl.when(k > 0)
    def _prop():
        cur = (k - 1) % 2                      # half holding h_{k-1}
        nxt = 1 - cur                          # half receiving h_k
        src0 = pl.multiple_of(cur * n_pad, tm)
        dst0 = pl.multiple_of(nxt * n_pad + row0, tm)

        h_prev = hbuf_ref[pl.ds(src0, n_pad), :]          # full previous state
        # bf16 x bf16 matmul on the MXU, f32 accumulation.
        prod = jnp.dot(adj_ref[...], h_prev.astype(adj_ref.dtype),
                       preferred_element_type=jnp.float32)
        h_new = (1.0 - ALPHA) * prod + ah0_ref[pl.ds(row0, tm), :]

        @pl.when(k < K_ITERS)
        def _store_state():
            hbuf_ref[pl.ds(dst0, tm), :] = h_new

        @pl.when(k == K_ITERS)
        def _store_out():
            out_ref[pl.ds(row0, tm), :] = h_new.astype(out_ref.dtype)


def appnp_forward(x, adj, w1, b1, w2, b2):
    n, f_in = x.shape
    hid = w1.shape[1]
    out_feats = w2.shape[1]

    n_pad = _round_up(n, TILE_M)
    f_in_pad = _round_up(f_in, LANE)
    hid_pad = _round_up(hid, LANE)
    out_pad = _round_up(out_feats, LANE)
    nt = n_pad // TILE_M

    pad2 = lambda a, r, c: jnp.pad(a, ((0, r - a.shape[0]), (0, c - a.shape[1])))

    x_p = pad2(x.astype(jnp.float32), n_pad, f_in_pad)
    adj_p = pad2(adj.astype(jnp.float32), n_pad, n_pad).astype(jnp.bfloat16)
    w1_p = pad2(w1, f_in_pad, hid_pad)
    b1_p = pad2(b1, 1, hid_pad)
    w2_p = pad2(w2, hid_pad, out_pad)
    b2_p = pad2(b2, 1, out_pad)

    # Advisory cost estimate so XLA schedules surrounding ops sensibly.
    flops = (2 * n_pad * (f_in_pad * hid_pad + hid_pad * out_pad)
             + 2 * K_ITERS * n_pad * n_pad * out_pad)
    adj_bytes = n_pad * n_pad * 2                      # bf16
    bytes_accessed = (adj_bytes * (K_ITERS if nt > 1 else 1)
                      + x_p.size * 4
                      + (w1_p.size + b1_p.size + w2_p.size + b2_p.size) * 4
                      + n_pad * out_pad * 4)
    cost = pl.CostEstimate(flops=flops, transcendentals=0,
                           bytes_accessed=bytes_accessed)

    out_p = pl.pallas_call(
        _appnp_kernel,
        out_shape=jax.ShapeDtypeStruct((n_pad, out_pad), jnp.float32),
        grid_spec=pltpu.PrefetchScalarGridSpec(
            num_scalar_prefetch=0,
            grid=(K_ITERS + 1, nt),
            in_specs=[
                pl.BlockSpec((TILE_M, f_in_pad), lambda k, i: (i, 0)),   # x tile
                pl.BlockSpec((TILE_M, n_pad), lambda k, i: (i, 0)),      # Adj tile
                pl.BlockSpec((f_in_pad, hid_pad), lambda k, i: (0, 0)),  # W1 (resident)
                pl.BlockSpec((1, hid_pad), lambda k, i: (0, 0)),         # b1
                pl.BlockSpec((hid_pad, out_pad), lambda k, i: (0, 0)),   # W2
                pl.BlockSpec((1, out_pad), lambda k, i: (0, 0)),         # b2
            ],
            # Full output stays resident in VMEM; written back to HBM once.
            out_specs=pl.BlockSpec((n_pad, out_pad), lambda k, i: (0, 0)),
            scratch_shapes=[
                pltpu.VMEM((n_pad, out_pad), jnp.float32),       # alpha * h0
                pltpu.VMEM((2 * n_pad, out_pad), jnp.float32),   # ping-pong h state
            ],
        ),
        compiler_params=pltpu.CompilerParams(
            dimension_semantics=("arbitrary", "arbitrary"),
            vmem_limit_bytes=64 * 1024 * 1024,
        ),
        cost_estimate=cost,
    )(x_p, adj_p, w1_p, b1_p, w2_p, b2_p)

    return out_p[:n, :out_feats]


def build_gcn_norm_adj(edge_index, num_nodes):
    """Dense GCN-normalized adjacency: D^-1/2 (A + I) D^-1/2.

    edge_index: int32 [2, E], row 0 = source, row 1 = target.
    (Adj @ h)[i] = sum_j norm_ij * h[j] over edges j->i, with self-loops.
    """
    # TODO(synk): PyG's gcn_norm sums duplicate edges / pre-existing self-loops
    # instead of deduplicating; this glue code dedupes via .set().
    src, dst = edge_index[0], edge_index[1]
    a = jnp.zeros((num_nodes, num_nodes), jnp.float32)
    a = a.at[dst, src].set(1.0)
    a = jnp.maximum(a, jnp.eye(num_nodes, dtype=jnp.float32))
    deg = a.sum(axis=1)
    dinv = jnp.where(deg > 0, 1.0 / jnp.sqrt(deg), 0.0)
    return dinv[:, None] * a * dinv[None, :]


def init_params(key, in_feats, hid_feats, out_feats):
    """PyTorch-Linear-style init (uniform +-1/sqrt(fan_in))."""
    k1, k2, k3, k4 = jax.random.split(key, 4)
    lim1 = 1.0 / jnp.sqrt(in_feats)
    lim2 = 1.0 / jnp.sqrt(hid_feats)
    w1 = jax.random.uniform(k1, (in_feats, hid_feats), jnp.float32, -lim1, lim1)
    b1 = jax.random.uniform(k2, (1, hid_feats), jnp.float32, -lim1, lim1)
    w2 = jax.random.uniform(k3, (hid_feats, out_feats), jnp.float32, -lim2, lim2)
    b2 = jax.random.uniform(k4, (1, out_feats), jnp.float32, -lim2, lim2)
    return w1, b1, w2, b2


def appnp_reference(x, adj, w1, b1, w2, b2):
    h = jnp.maximum(x @ w1 + b1, 0.0)
    h0 = h @ w2 + b2
    h = h0
    for _ in range(K_ITERS):
        h = (1.0 - ALPHA) * (adj @ h) + ALPHA * h0
    return h


if __name__ == "__main__":
    # Small deterministic problem: 16 nodes, 8 input feats, 32 hidden, 3 classes.
    N, IN_FEATS, HID_FEATS, OUT_FEATS, E = 16, 8, 32, 3, 40

    key = jax.random.PRNGKey(0)
    kx, ke, kp = jax.random.split(key, 3)

    x = jax.random.normal(kx, (N, IN_FEATS), jnp.float32)
    edge_index = jax.random.randint(ke, (2, E), 0, N, dtype=jnp.int32)

    w1, b1, w2, b2 = init_params(kp, IN_FEATS, HID_FEATS, OUT_FEATS)
    adj = build_gcn_norm_adj(edge_index, N)

    logits = appnp_forward(x, adj, w1, b1, w2, b2)
    jax.block_until_ready(logits)
    assert logits.shape == (N, OUT_FEATS)

    # Validate against the pure-JAX f32 reference (bf16 Adj => small tolerance).
    ref = appnp_reference(x, adj, w1, b1, w2, b2)
    max_err = float(jnp.max(jnp.abs(logits - ref)))
    assert max_err < 5e-2, f"max abs err {max_err}"

    print("KERNEL_OK")
</pallas_src>

<mosaic_0001>
module attributes {stable_mosaic.version = 11 : i64} {
  func.func @_appnp_kernel(%arg0: i32, %arg1: i32, %arg2: memref<128x128xf32, #tpu.memory_space<vmem>>, %arg3: memref<128x128xbf16, #tpu.memory_space<vmem>>, %arg4: memref<128x128xf32, #tpu.memory_space<vmem>>, %arg5: memref<1x128xf32, #tpu.memory_space<vmem>>, %arg6: memref<128x128xf32, #tpu.memory_space<vmem>>, %arg7: memref<1x128xf32, #tpu.memory_space<vmem>>, %arg8: memref<128x128xf32, #tpu.memory_space<vmem>>, %arg9: memref<128x128xf32, #tpu.memory_space<vmem>>, %arg10: memref<256x128xf32, #tpu.memory_space<vmem>>) attributes {dimension_semantics = [#tpu.dimension_semantics<arbitrary>, #tpu.dimension_semantics<arbitrary>], iteration_bounds = array<i64: 11, 1>, scalar_prefetch = 0 : i64, scratch_operands = 2 : i64, tpu.core_type = #tpu.core_type<tc>, window_params = [{transform_indices = @transform_0, window_bounds = array<i64: 128, 128>}, {transform_indices = @transform_1, window_bounds = array<i64: 128, 128>}, {pipeline_mode = #tpu.pipeline_mode<synchronous>, transform_indices = @transform_2, window_bounds = array<i64: 128, 128>}, {pipeline_mode = #tpu.pipeline_mode<synchronous>, transform_indices = @transform_3, window_bounds = array<i64: 1, 128>}, {pipeline_mode = #tpu.pipeline_mode<synchronous>, transform_indices = @transform_4, window_bounds = array<i64: 128, 128>}, {pipeline_mode = #tpu.pipeline_mode<synchronous>, transform_indices = @transform_5, window_bounds = array<i64: 1, 128>}, {pipeline_mode = #tpu.pipeline_mode<synchronous>, transform_indices = @transform_6, window_bounds = array<i64: 128, 128>}]} {
    %c128_i32 = arith.constant 128 : i32
    %0 = arith.muli %arg1, %c128_i32 : i32
    %1 = tpu.assume_multiple %0, 128 : i32
    %c0_i32 = arith.constant 0 : i32
    %2 = arith.cmpi eq, %arg0, %c0_i32 : i32
    %3 = arith.extui %2 : i1 to i32
    %c0_i32_0 = arith.constant 0 : i32
    %4 = arith.cmpi ne, %3, %c0_i32_0 : i32
    scf.if %4 {
      %c0 = arith.constant 0 : index
      %c0_3 = arith.constant 0 : index
      %8 = vector.load %arg2[%c0, %c0_3] : memref<128x128xf32, #tpu.memory_space<vmem>>, vector<128x128xf32>
      %c0_4 = arith.constant 0 : index
      %c0_5 = arith.constant 0 : index
      %9 = vector.load %arg4[%c0_4, %c0_5] : memref<128x128xf32, #tpu.memory_space<vmem>>, vector<128x128xf32>
      %cst = arith.constant dense<0.000000e+00> : vector<128x128xf32>
      %10 = tpu.matmul %8, %9, %cst {dimension_numbers = #tpu.dot_dimension_numbers<[1], [0], [0], [1], [0, 0, 1, 1], [], []>} : vector<128x128xf32>, vector<128x128xf32>, vector<128x128xf32> -> vector<128x128xf32>
      %c0_6 = arith.constant 0 : index
      %c0_7 = arith.constant 0 : index
      %11 = vector.load %arg5[%c0_6, %c0_7] : memref<1x128xf32, #tpu.memory_space<vmem>>, vector<1x128xf32>
      %12 = vector.broadcast %11 : vector<1x128xf32> to vector<128x128xf32>
      %13 = arith.addf %10, %12 : vector<128x128xf32>
      %cst_8 = arith.constant 0.000000e+00 : f32
      %14 = vector.broadcast %cst_8 : f32 to vector<128x128xf32>
      %15 = arith.maximumf %13, %14 : vector<128x128xf32>
      %c0_9 = arith.constant 0 : index
      %c0_10 = arith.constant 0 : index
      %16 = vector.load %arg6[%c0_9, %c0_10] : memref<128x128xf32, #tpu.memory_space<vmem>>, vector<128x128xf32>
      %cst_11 = arith.constant dense<0.000000e+00> : vector<128x128xf32>
      %17 = tpu.matmul %15, %16, %cst_11 {dimension_numbers = #tpu.dot_dimension_numbers<[1], [0], [0], [1], [0, 0, 1, 1], [], []>} : vector<128x128xf32>, vector<128x128xf32>, vector<128x128xf32> -> vector<128x128xf32>
      %c0_12 = arith.constant 0 : index
      %c0_13 = arith.constant 0 : index
      %18 = vector.load %arg7[%c0_12, %c0_13] : memref<1x128xf32, #tpu.memory_space<vmem>>, vector<1x128xf32>
      %19 = vector.broadcast %18 : vector<1x128xf32> to vector<128x128xf32>
      %20 = arith.addf %17, %19 : vector<128x128xf32>
      %21 = arith.index_cast %1 : i32 to index
      %c0_14 = arith.constant 0 : index
      %22 = vector.load %arg10[%21, %c0_14] : memref<256x128xf32, #tpu.memory_space<vmem>>, vector<128x128xf32>
      tpu.vector_store %arg10[%21, %c0_14], %20 {strides = array<i32>} : memref<256x128xf32, #tpu.memory_space<vmem>>, vector<128x128xf32>,
      %cst_15 = arith.constant 1.000000e-01 : f32
      %23 = vector.broadcast %cst_15 : f32 to vector<128x128xf32>
      %24 = arith.mulf %23, %20 : vector<128x128xf32>
      %25 = arith.index_cast %1 : i32 to index
      %c0_16 = arith.constant 0 : index
      %26 = vector.load %arg9[%25, %c0_16] : memref<128x128xf32, #tpu.memory_space<vmem>>, vector<128x128xf32>
      tpu.vector_store %arg9[%25, %c0_16], %24 {strides = array<i32>} : memref<128x128xf32, #tpu.memory_space<vmem>>, vector<128x128xf32>,
    } else {
    }
    %c0_i32_1 = arith.constant 0 : i32
    %5 = arith.cmpi sgt, %arg0, %c0_i32_1 : i32
    %6 = arith.extui %5 : i1 to i32
    %c0_i32_2 = arith.constant 0 : i32
    %7 = arith.cmpi ne, %6, %c0_i32_2 : i32
    scf.if %7 {
      %c1_i32 = arith.constant 1 : i32
      %8 = arith.subi %arg0, %c1_i32 : i32
      %c2_i32 = arith.constant 2 : i32
      %c0_i32_3 = arith.constant 0 : i32
      %9 = arith.cmpi eq, %c2_i32, %c0_i32_3 : i32
      %c1_i32_4 = arith.constant 1 : i32
      %10 = arith.select %9, %c1_i32_4, %c2_i32 : i32
      %11 = arith.remsi %8, %10 : i32
      %c0_i32_5 = arith.constant 0 : i32
      %12 = arith.cmpi ne, %11, %c0_i32_5 : i32
      %c0_i32_6 = arith.constant 0 : i32
      %13 = arith.cmpi slt, %11, %c0_i32_6 : i32
      %c0_i32_7 = arith.constant 0 : i32
      %14 = arith.cmpi slt, %10, %c0_i32_7 : i32
      %15 = arith.xori %13, %14 : i1
      %16 = arith.andi %15, %12 : i1
      %17 = arith.addi %11, %10 : i32
      %18 = arith.select %16, %17, %11 : i32
      %c1_i32_8 = arith.constant 1 : i32
      %19 = arith.subi %c1_i32_8, %18 : i32
      %c128_i32_9 = arith.constant 128 : i32
      %20 = arith.muli %18, %c128_i32_9 : i32
      %21 = tpu.assume_multiple %20, 128 : i32
      %c128_i32_10 = arith.constant 128 : i32
      %22 = arith.muli %19, %c128_i32_10 : i32
      %23 = arith.addi %22, %1 : i32
      %24 = tpu.assume_multiple %23, 128 : i32
      %25 = arith.index_cast %21 : i32 to index
      %c0 = arith.constant 0 : index
      %26 = vector.load %arg10[%25, %c0] : memref<256x128xf32, #tpu.memory_space<vmem>>, vector<128x128xf32>
      %c0_11 = arith.constant 0 : index
      %c0_12 = arith.constant 0 : index
      %27 = vector.load %arg3[%c0_11, %c0_12] : memref<128x128xbf16, #tpu.memory_space<vmem>>, vector<128x128xbf16>
      %28 = arith.truncf %26 : vector<128x128xf32> to vector<128x128xbf16>
      %cst = arith.constant dense<0.000000e+00> : vector<128x128xf32>
      %29 = tpu.matmul %27, %28, %cst {dimension_numbers = #tpu.dot_dimension_numbers<[1], [0], [0], [1], [0, 0, 1, 1], [], []>} : vector<128x128xbf16>, vector<128x128xbf16>, vector<128x128xf32> -> vector<128x128xf32>
      %cst_13 = arith.constant 0.899999976 : f32
      %30 = vector.broadcast %cst_13 : f32 to vector<128x128xf32>
      %31 = arith.mulf %30, %29 : vector<128x128xf32>
      %32 = arith.index_cast %1 : i32 to index
      %c0_14 = arith.constant 0 : index
      %33 = vector.load %arg9[%32, %c0_14] : memref<128x128xf32, #tpu.memory_space<vmem>>, vector<128x128xf32>
      %34 = arith.addf %31, %33 : vector<128x128xf32>
      %c10_i32 = arith.constant 10 : i32
      %35 = arith.cmpi slt, %arg0, %c10_i32 : i32
      %36 = arith.extui %35 : i1 to i32
      %c0_i32_15 = arith.constant 0 : i32
      %37 = arith.cmpi ne, %36, %c0_i32_15 : i32
      scf.if %37 {
        %41 = arith.index_cast %24 : i32 to index
        %c0_18 = arith.constant 0 : index
        %42 = vector.load %arg10[%41, %c0_18] : memref<256x128xf32, #tpu.memory_space<vmem>>, vector<128x128xf32>
        tpu.vector_store %arg10[%41, %c0_18], %34 {strides = array<i32>} : memref<256x128xf32, #tpu.memory_space<vmem>>, vector<128x128xf32>,
      } else {
      }
      %c10_i32_16 = arith.constant 10 : i32
      %38 = arith.cmpi eq, %arg0, %c10_i32_16 : i32
      %39 = arith.extui %38 : i1 to i32
      %c0_i32_17 = arith.constant 0 : i32
      %40 = arith.cmpi ne, %39, %c0_i32_17 : i32
      scf.if %40 {
        %41 = arith.index_cast %1 : i32 to index
        %c0_18 = arith.constant 0 : index
        %42 = vector.load %arg8[%41, %c0_18] : memref<128x128xf32, #tpu.memory_space<vmem>>, vector<128x128xf32>
        tpu.vector_store %arg8[%41, %c0_18], %34 {strides = array<i32>} : memref<128x128xf32, #tpu.memory_space<vmem>>, vector<128x128xf32>,
      } else {
      }
    } else {
    }
    return
  }
  func.func @transform_0(%arg0: i32, %arg1: i32) -> (i32, i32) {
    %c0_i32 = arith.constant 0 : i32
    %c0_i32_0 = arith.constant 0 : i32
    return %arg1, %c0_i32 : i32, i32
  }
  func.func @transform_1(%arg0: i32, %arg1: i32) -> (i32, i32) {
    %c0_i32 = arith.constant 0 : i32
    %c0_i32_0 = arith.constant 0 : i32
    return %arg1, %c0_i32 : i32, i32
  }
  func.func @transform_2(%arg0: i32, %arg1: i32) -> (i32, i32) {
    %c0_i32 = arith.constant 0 : i32
    %c0_i32_0 = arith.constant 0 : i32
    %c0_i32_1 = arith.constant 0 : i32
    return %c0_i32, %c0_i32_0 : i32, i32
  }
  func.func @transform_3(%arg0: i32, %arg1: i32) -> (i32, i32) {
    %c0_i32 = arith.constant 0 : i32
    %c0_i32_0 = arith.constant 0 : i32
    %c0_i32_1 = arith.constant 0 : i32
    return %c0_i32, %c0_i32_0 : i32, i32
  }
  func.func @transform_4(%arg0: i32, %arg1: i32) -> (i32, i32) {
    %c0_i32 = arith.constant 0 : i32
    %c0_i32_0 = arith.constant 0 : i32
    %c0_i32_1 = arith.constant 0 : i32
    return %c0_i32, %c0_i32_0 : i32, i32
  }
  func.func @transform_5(%arg0: i32, %arg1: i32) -> (i32, i32) {
    %c0_i32 = arith.constant 0 : i32
    %c0_i32_0 = arith.constant 0 : i32
    %c0_i32_1 = arith.constant 0 : i32
    return %c0_i32, %c0_i32_0 : i32, i32
  }
  func.func @transform_6(%arg0: i32, %arg1: i32) -> (i32, i32) {
    %c0_i32 = arith.constant 0 : i32
    %c0_i32_0 = arith.constant 0 : i32
    %c0_i32_1 = arith.constant 0 : i32
    return %c0_i32, %c0_i32_0 : i32, i32
  }
}

</mosaic_0001>

<llo_original>
// kernel: tpu_custom_call.1
$region0: #{tpu_custom_call.1}
  #allocation0 [shape = 'u32[]', space=smem, size = 0x4, offset = 0x4, fixed_abs, tag = 'smem constant byte address 0x4 - core index']
  #allocation1 [shape = 'u32[144,128]{1,0:T(1,128)}', space=vmem, size = 0x12000, scoped, tag = 'internal scratch']
  #allocation2 [shape = 'f32[128,128]{1,0:T(8,128)}', space=vmem, size = 0x10000, scoped, tag = 'scratch operand']
  #allocation3 [shape = 'f32[256,128]{1,0:T(8,128)}', space=vmem, size = 0x20000, scoped, tag = 'scratch operand']
  %s0 = inlined_call_operand.hbm [shape: f32[128,128], index: 0, kind: input, shape index: {}]
  %s1 = inlined_call_operand.hbm [shape: bf16[128,128], index: 1, kind: input, shape index: {}]
  %s2 = inlined_call_operand.hbm [shape: f32[128,128], index: 2, kind: input, shape index: {}]
  %s3 = inlined_call_operand.hbm [shape: f32[1,128], index: 3, kind: input, shape index: {}]
  %s4 = inlined_call_operand.hbm [shape: f32[128,128], index: 4, kind: input, shape index: {}]
  %s5 = inlined_call_operand.hbm [shape: f32[1,128], index: 5, kind: input, shape index: {}]
  %s6 = inlined_call_operand.hbm [shape: f32[128,128], index: 6, kind: output, shape index: {}]
  %s7 = sld [smem:[#allocation0]]
  $region97: #{tpu_custom_call.1} parent=0
    _
  %s9 = ssub.s32 1, %s7
  %s10 = scalar_select 0, %s9, %s7
  $region1: #{tpu_custom_call.1} parent=0
    #allocation4 [shape = 'u8[65536]{0}', space=vmem, size = 0x10000, scoped, tag = 'input window, operand 0, single buffered']
    #allocation5 [shape = 's32[2]{0}', space=sflag, size = 0x8, scoped, tag = 'scoped memory for tpu_custom_call.1']
    #allocation6 [shape = 's32[2]{0}', space=sflag, size = 0x8, scoped, tag = 'scoped memory for tpu_custom_call.1']
    #allocation7 [shape = 'u8[32768]{0}', space=vmem, size = 0x8000, scoped, tag = 'input window, operand 1, single buffered']
    #allocation8 [shape = 's32[1]{0}', space=sflag, size = 0x4, scoped, tag = 'scoped memory for tpu_custom_call.1']
    #allocation9 [shape = 'u8[65536]{0}', space=vmem, size = 0x10000, scoped, tag = 'input window, operand 2, single buffered']
    #allocation10 [shape = 'u8[512]{0}', space=vmem, size = 0x400, scoped, tag = 'input window, operand 3, single buffered']
    #allocation11 [shape = 's32[1]{0}', space=sflag, size = 0x4, scoped, tag = 'scoped memory for tpu_custom_call.1']
    #allocation12 [shape = 'u8[65536]{0}', space=vmem, size = 0x10000, scoped, tag = 'input window, operand 4, single buffered']
    #allocation13 [shape = 'u8[512]{0}', space=vmem, size = 0x400, scoped, tag = 'input window, operand 5, single buffered']
    #allocation14 [shape = 's32[1]{0}', space=sflag, size = 0x4, scoped, tag = 'scoped memory for tpu_custom_call.1']
    #allocation15 [shape = 'u8[65536]{0}', space=vmem, size = 0x10000, scoped, tag = 'output window, operand 0, single buffered']
    %11 = vsyncpa [#allocation5], 0
    %12 = vsyncpa [#allocation8], 0
    %13 = vsyncpa [#allocation11], 0
    %14 = vsyncpa [#allocation14], 0
    %15 = vsyncpa [#allocation6], 0
    loop: start=0, step=1, limit=13
    $region2: #{tpu_custom_call.1} parent=1 // loop_pre_header
      _
    $region3: #{tpu_custom_call.1} parent=1 // loop_header
      %s17 = sphi 0, %s21
      %p18 = scmp.ge.s32.totalorder %s17, 13
      %s24 = sphi 0, %s36
      %s25 = sphi 0, %s32
      %s26 = sphi 0, %s24
      %s27 = sphi 0, %s25
      %s28 = sphi 0, %s26
      %s29 = sphi 0, %s27
      %s39 = sphi 0, %s41
      %s42 = sphi 0, %s39
      %s43 = sphi 0, %s42
      %s59 = sphi 0, %s43
      %s65 = sphi 0, %s67
      %s68 = sphi 0, %s65
      %s69 = sphi 0, %s68
      %s85 = sphi 0, %s69
      %s89 = sphi 0, %s89
      %s91 = sphi 0, %s89
      %s92 = sphi 0, %s91
      %s106 = sphi 0, %s92
      %s110 = sphi 0, %s110
      %s112 = sphi 0, %s110
      %s113 = sphi 0, %s112
      %s127 = sphi 0, %s113
      %s131 = sphi 0, %s131
      %s133 = sphi 0, %s131
      %s134 = sphi 0, %s133
      %s148 = sphi 0, %s134
      %s152 = sphi 0, %s152
      %s154 = sphi 0, %s152
      %s155 = sphi 0, %s154
      %s169 = sphi 0, %s155
      %s173 = sphi 0, %s173
      %s175 = sphi 0, %s173
      %s176 = sphi 0, %s175
      %s190 = sphi 0, %s176
    $region4: #{tpu_custom_call.1} parent=1 // loop_header_branch
      %20 = sbr.rel (%p18) target = $region8
    $region5: #{tpu_custom_call.1} parent=1 // loop_body
      %s22 = ssub.s32 %s17, 1
      %s23 = ssub.s32 %s17, 2
      %s30 = sadd.s32 1, %s25
      %p31 = scmp.ge.s32.totalorder %s30, 1
      %s32 = scalar_select %p31, 0, %s30
      %s33 = sadd.s32 1, %s24
      %s34 = scalar_select %p31, %s33, %s24
      %p35 = scmp.ge.s32.totalorder %s34, 11
      %s36 = scalar_select %p35, 0, %s34
      %s37 = ssub.s32 %s25, %s32
      %p38 = scmp.eq.s32.totalorder %s37, 0
      %s40 = sadd.s32 %s39, 1
      %s41 = scalar_select %p38, %s39, %s40
      %p44 = pneg %p38
      %p45 = scmp.eq.s32.totalorder %s17, 10
      %p46 = por %p44, %p45
      %p47 = scmp.ne.s32.totalorder %s39, %s42
      %p48 = scmp.eq.s32.totalorder %s17, 0
      %p49 = por %p47, %p48
      %p50 = scmp.ne.s32.totalorder %s39, %s42
      %p51 = scmp.eq.s32.totalorder %s22, 10
      %p52 = por %p50, %p51
      %p53 = scmp.ne.s32.totalorder %s42, %s43
      %p54 = scmp.eq.s32.totalorder %s22, 0
      %p55 = por %p53, %p54
      %p56 = scmp.ne.s32.totalorder %s42, %s43
      %p57 = scmp.eq.s32.totalorder %s23, 10
      %p58 = por %p56, %p57
      %p60 = scmp.ne.s32.totalorder %s43, %s59
      %p61 = scmp.eq.s32.totalorder %s23, 0
      %p62 = por %p60, %p61
      %s63 = ssub.s32 %s25, %s32
      %p64 = scmp.eq.s32.totalorder %s63, 0
      %s66 = sadd.s32 %s65, 1
      %s67 = scalar_select %p64, %s65, %s66
      %p70 = pneg %p64
      %p71 = scmp.eq.s32.totalorder %s17, 10
      %p72 = por %p70, %p71
      %p73 = scmp.ne.s32.totalorder %s65, %s68
      %p74 = scmp.eq.s32.totalorder %s17, 0
      %p75 = por %p73, %p74
      %p76 = scmp.ne.s32.totalorder %s65, %s68
      %p77 = scmp.eq.s32.totalorder %s22, 10
      %p78 = por %p76, %p77
      %p79 = scmp.ne.s32.totalorder %s68, %s69
      %p80 = scmp.eq.s32.totalorder %s22, 0
      %p81 = por %p79, %p80
      %p82 = scmp.ne.s32.totalorder %s68, %s69
      %p83 = scmp.eq.s32.totalorder %s23, 10
      %p84 = por %p82, %p83
      %p86 = scmp.ne.s32.totalorder %s69, %s85
      %p87 = scmp.eq.s32.totalorder %s23, 0
      %p88 = por %p86, %p87
      %s90 = sadd.s32 %s89, 1
      %p93 = scmp.eq.s32.totalorder %s17, 10
      %p94 = scmp.ne.s32.totalorder %s89, %s91
      %p95 = scmp.eq.s32.totalorder %s17, 0
      %p96 = por %p94, %p95
      %p97 = scmp.ne.s32.totalorder %s89, %s91
      %p98 = scmp.eq.s32.totalorder %s22, 10
      %p99 = por %p97, %p98
      %p100 = scmp.ne.s32.totalorder %s91, %s92
      %p101 = scmp.eq.s32.totalorder %s22, 0
      %p102 = por %p100, %p101
      %p103 = scmp.ne.s32.totalorder %s91, %s92
      %p104 = scmp.eq.s32.totalorder %s23, 10
      %p105 = por %p103, %p104
      %p107 = scmp.ne.s32.totalorder %s92, %s106
      %p108 = scmp.eq.s32.totalorder %s23, 0
      %p109 = por %p107, %p108
      %s111 = sadd.s32 %s110, 1
      %p114 = scmp.eq.s32.totalorder %s17, 10
      %p115 = scmp.ne.s32.totalorder %s110, %s112
      %p116 = scmp.eq.s32.totalorder %s17, 0
      %p117 = por %p115, %p116
      %p118 = scmp.ne.s32.totalorder %s110, %s112
      %p119 = scmp.eq.s32.totalorder %s22, 10
      %p120 = por %p118, %p119
      %p121 = scmp.ne.s32.totalorder %s112, %s113
      %p122 = scmp.eq.s32.totalorder %s22, 0
      %p123 = por %p121, %p122
      %p124 = scmp.ne.s32.totalorder %s112, %s113
      %p125 = scmp.eq.s32.totalorder %s23, 10
      %p126 = por %p124, %p125
      %p128 = scmp.ne.s32.totalorder %s113, %s127
      %p129 = scmp.eq.s32.totalorder %s23, 0
      %p130 = por %p128, %p129
      %s132 = sadd.s32 %s131, 1
      %p135 = scmp.eq.s32.totalorder %s17, 10
      %p136 = scmp.ne.s32.totalorder %s131, %s133
      %p137 = scmp.eq.s32.totalorder %s17, 0
      %p138 = por %p136, %p137
      %p139 = scmp.ne.s32.totalorder %s131, %s133
      %p140 = scmp.eq.s32.totalorder %s22, 10
      %p141 = por %p139, %p140
      %p142 = scmp.ne.s32.totalorder %s133, %s134
      %p143 = scmp.eq.s32.totalorder %s22, 0
      %p144 = por %p142, %p143
      %p145 = scmp.ne.s32.totalorder %s133, %s134
      %p146 = scmp.eq.s32.totalorder %s23, 10
      %p147 = por %p145, %p146
      %p149 = scmp.ne.s32.totalorder %s134, %s148
      %p150 = scmp.eq.s32.totalorder %s23, 0
      %p151 = por %p149, %p150
      %s153 = sadd.s32 %s152, 1
      %p156 = scmp.eq.s32.totalorder %s17, 10
      %p157 = scmp.ne.s32.totalorder %s152, %s154
      %p158 = scmp.eq.s32.totalorder %s17, 0
      %p159 = por %p157, %p158
      %p160 = scmp.ne.s32.totalorder %s152, %s154
      %p161 = scmp.eq.s32.totalorder %s22, 10
      %p162 = por %p160, %p161
      %p163 = scmp.ne.s32.totalorder %s154, %s155
      %p164 = scmp.eq.s32.totalorder %s22, 0
      %p165 = por %p163, %p164
      %p166 = scmp.ne.s32.totalorder %s154, %s155
      %p167 = scmp.eq.s32.totalorder %s23, 10
      %p168 = por %p166, %p167
      %p170 = scmp.ne.s32.totalorder %s155, %s169
      %p171 = scmp.eq.s32.totalorder %s23, 0
      %p172 = por %p170, %p171
      %s174 = sadd.s32 %s173, 1
      %p177 = scmp.eq.s32.totalorder %s17, 10
      %p178 = scmp.ne.s32.totalorder %s173, %s175
      %p179 = scmp.eq.s32.totalorder %s17, 0
      %p180 = por %p178, %p179
      %p181 = scmp.ne.s32.totalorder %s173, %s175
      %p182 = scmp.eq.s32.totalorder %s22, 10
      %p183 = por %p181, %p182
      %p184 = scmp.ne.s32.totalorder %s175, %s176
      %p185 = scmp.eq.s32.totalorder %s22, 0
      %p186 = por %p184, %p185
      %p187 = scmp.ne.s32.totalorder %s175, %s176
      %p188 = scmp.eq.s32.totalorder %s23, 10
      %p189 = por %p187, %p188
      %p191 = scmp.ne.s32.totalorder %s176, %s190
      %p192 = scmp.eq.s32.totalorder %s23, 0
      %p193 = por %p191, %p192
      %p194 = scmp.le.s32.totalorder 1, %s17
      %p195 = scmp.lt.s32.totalorder %s17, 12
      %p196 = pnand %p194, %p195
      %p197 = pneg %p196
      // Predicated region
      $region9: #{tpu_custom_call.1} parent=5 // pred_check
        _
      $region10: #{tpu_custom_call.1} parent=5 // pred_check_branch
        %199 = sbr.rel (%p196) target = $region12
      $region11: #{tpu_custom_call.1} parent=5 // pred_region
        %s200 = ssub.s32 %s17, 1
        // Predicated region
        $region13: #{tpu_custom_call.1} parent=11 // pred_check
          %p201 = pneg %p55
        $region14: #{tpu_custom_call.1} parent=11 // pred_check_branch
          %203 = sbr.rel (%p201) target = $region16
        $region15: #{tpu_custom_call.1} parent=11 // pred_region
          %s204 = smul.u32 16, %s27
          %s206 = ssub.s32 2048, 2048
          %207 = vsyncadd [#allocation5], %s206
          %s208 = smul.addr %s204, 128
          %s209 = scalar_lea.hbm %s0, %s208
          %s210 = sshll.u32 [#allocation4], 4
          %s211 = int_to_ptr.vmem [resolvable:$true] %s210
          %216 = dma.hbm_to_vmem [thread:$0]  %s209, 2048, %s211, [#allocation5], 128, 128, 8
        $region16: #{tpu_custom_call.1} parent=11 // pred_fallthru
          _
        // Predicated region
        $region17: #{tpu_custom_call.1} parent=11 // pred_check
          %p217 = pneg %p81
        $region18: #{tpu_custom_call.1} parent=11 // pred_check_branch
          %219 = sbr.rel (%p217) target = $region20
        $region19: #{tpu_custom_call.1} parent=11 // pred_region
          %s220 = smul.u32 16, %s27
          %s222 = ssub.s32 1024, 1024
          %223 = vsyncadd [#allocation8], %s222
          %s224 = smul.addr %s220, 64
          %s225 = scalar_lea.hbm %s1, %s224
          %s226 = sshll.u32 [#allocation7], 4
          %s227 = int_to_ptr.vmem [resolvable:$true] %s226
          %232 = dma.hbm_to_vmem [thread:$0]  %s225, 1024, %s227, [#allocation8], 64, 64, 4
        $region20: #{tpu_custom_call.1} parent=11 // pred_fallthru
          _
        // Predicated region
        $region21: #{tpu_custom_call.1} parent=11 // pred_check
          %p233 = pneg %p102
        $region22: #{tpu_custom_call.1} parent=11 // pred_check_branch
          %235 = sbr.rel (%p233) target = $region24
        $region23: #{tpu_custom_call.1} parent=11 // pred_region
          %s237 = ssub.s32 2048, 2048
          %238 = vsyncadd [#allocation8], %s237
          %s239 = sshll.u32 [#allocation9], 4
          %s240 = int_to_ptr.vmem [resolvable:$true] %s239
          %245 = dma.hbm_to_vmem [thread:$0]  %s2, 2048, %s240, [#allocation8], 128, 128, 8
        $region24: #{tpu_custom_call.1} parent=11 // pred_fallthru
          _
        // Predicated region
        $region25: #{tpu_custom_call.1} parent=11 // pred_check
          %p246 = pneg %p123
        $region26: #{tpu_custom_call.1} parent=11 // pred_check_branch
          %248 = sbr.rel (%p246) target = $region28
        $region27: #{tpu_custom_call.1} parent=11 // pred_region
          %s250 = ssub.s32 16, 16
          %251 = vsyncadd [#allocation11], %s250
          %s253 = sshll.u32 [#allocation10], 4
          %s254 = int_to_ptr.vmem [resolvable:$true] %s253
          %256 = dma.hbm_to_vmem [thread:$0]  %s3, 16, %s254, [#allocation11]
        $region28: #{tpu_custom_call.1} parent=11 // pred_fallthru
          _
        // Predicated region
        $region29: #{tpu_custom_call.1} parent=11 // pred_check
          %p257 = pneg %p144
        $region30: #{tpu_custom_call.1} parent=11 // pred_check_branch
          %259 = sbr.rel (%p257) target = $region32
        $region31: #{tpu_custom_call.1} parent=11 // pred_region
          %s261 = ssub.s32 2048, 2048
          %262 = vsyncadd [#allocation11], %s261
          %s263 = sshll.u32 [#allocation12], 4
          %s264 = int_to_ptr.vmem [resolvable:$true] %s263
          %269 = dma.hbm_to_vmem [thread:$0]  %s4, 2048, %s264, [#allocation11], 128, 128, 8
        $region32: #{tpu_custom_call.1} parent=11 // pred_fallthru
          _
        // Predicated region
        $region33: #{tpu_custom_call.1} parent=11 // pred_check
          %p270 = pneg %p165
        $region34: #{tpu_custom_call.1} parent=11 // pred_check_branch
          %272 = sbr.rel (%p270) target = $region36
        $region35: #{tpu_custom_call.1} parent=11 // pred_region
          %s274 = ssub.s32 16, 16
          %275 = vsyncadd [#allocation14], %s274
          %s277 = sshll.u32 [#allocation13], 4
          %s278 = int_to_ptr.vmem [resolvable:$true] %s277
          %280 = dma.hbm_to_vmem [thread:$0]  %s5, 16, %s278, [#allocation14]
        $region36: #{tpu_custom_call.1} parent=11 // pred_fallthru
          _
      $region12: #{tpu_custom_call.1} parent=5 // pred_fallthru
        _
      %p281 = scmp.lt.s32.totalorder %s17, 11
      // Predicated region
      $region37: #{tpu_custom_call.1} parent=5 // pred_check
        %p282 = pneg %p281
      $region38: #{tpu_custom_call.1} parent=5 // pred_check_branch
        %284 = sbr.rel (%p282) target = $region40
      $region39: #{tpu_custom_call.1} parent=5 // pred_region
        _
      $region40: #{tpu_custom_call.1} parent=5 // pred_fallthru
        _
      %p285 = scmp.le.s32.totalorder 1, %s17
      %p286 = scmp.lt.s32.totalorder %s17, 12
      %p287 = pnand %p285, %p286
      %p288 = pneg %p287
      // Predicated region
      $region41: #{tpu_custom_call.1} parent=5 // pred_check
        _
      $region42: #{tpu_custom_call.1} parent=5 // pred_check_branch
        %290 = sbr.rel (%p287) target = $region44
      $region43: #{tpu_custom_call.1} parent=5 // pred_region
        %s291 = ssub.s32 %s17, 1
        // Predicated region
        $region45: #{tpu_custom_call.1} parent=43 // pred_check
          %p292 = pneg %p55
        $region46: #{tpu_custom_call.1} parent=43 // pred_check_branch
          %294 = sbr.rel (%p292) target = $region48
        $region47: #{tpu_custom_call.1} parent=43 // pred_region
          %295 = dma.done [#allocation5], 2048
        $region48: #{tpu_custom_call.1} parent=43 // pred_fallthru
          _
        // Predicated region
        $region49: #{tpu_custom_call.1} parent=43 // pred_check
          %p296 = pneg %p81
        $region50: #{tpu_custom_call.1} parent=43 // pred_check_branch
          %298 = sbr.rel (%p296) target = $region52
        $region51: #{tpu_custom_call.1} parent=43 // pred_region
          %299 = dma.done [#allocation8], 1024
        $region52: #{tpu_custom_call.1} parent=43 // pred_fallthru
          _
        // Predicated region
        $region53: #{tpu_custom_call.1} parent=43 // pred_check
          %p300 = pneg %p102
        $region54: #{tpu_custom_call.1} parent=43 // pred_check_branch
          %302 = sbr.rel (%p300) target = $region56
        $region55: #{tpu_custom_call.1} parent=43 // pred_region
          %303 = dma.done [#allocation8], 2048
        $region56: #{tpu_custom_call.1} parent=43 // pred_fallthru
          _
        // Predicated region
        $region57: #{tpu_custom_call.1} parent=43 // pred_check
          %p304 = pneg %p123
        $region58: #{tpu_custom_call.1} parent=43 // pred_check_branch
          %306 = sbr.rel (%p304) target = $region60
        $region59: #{tpu_custom_call.1} parent=43 // pred_region
          %307 = dma.done [#allocation11], 16
        $region60: #{tpu_custom_call.1} parent=43 // pred_fallthru
          _
        // Predicated region
        $region61: #{tpu_custom_call.1} parent=43 // pred_check
          %p308 = pneg %p144
        $region62: #{tpu_custom_call.1} parent=43 // pred_check_branch
          %310 = sbr.rel (%p308) target = $region64
        $region63: #{tpu_custom_call.1} parent=43 // pred_region
          %311 = dma.done [#allocation11], 2048
        $region64: #{tpu_custom_call.1} parent=43 // pred_fallthru
          _
        // Predicated region
        $region65: #{tpu_custom_call.1} parent=43 // pred_check
          %p312 = pneg %p165
        $region66: #{tpu_custom_call.1} parent=43 // pred_check_branch
          %314 = sbr.rel (%p312) target = $region68
        $region67: #{tpu_custom_call.1} parent=43 // pred_region
          %315 = dma.done [#allocation14], 16
        $region68: #{tpu_custom_call.1} parent=43 // pred_fallthru
          _
        %p316 = pneg %p55
        %p317 = pneg %p52
        %p318 = pneg %p81
        %p319 = pneg %p78
        %p320 = pneg %p102
        %p321 = pneg %p99
        %p322 = pneg %p123
        %p323 = pneg %p120
        %p324 = pneg %p144
        %p325 = pneg %p141
        %p326 = pneg %p165
        %p327 = pneg %p162
        %p328 = pneg %p186
        %p329 = pneg %p183
        %s330 = smul.u32 16, %s27
        %s331 = smul.u32 16, %s27
        %s333 = smul.u32 %s27, 128
        %p334 = scmp.eq.s32.totalorder %s26, 0
        // Predicated region
        $region69: #{tpu_custom_call.1} parent=43 // pred_check
          %p335 = pneg %p334
        $region70: #{tpu_custom_call.1} parent=43 // pred_check_branch
          %337 = sbr.rel (%p335) target = $region72
        $region71: #{tpu_custom_call.1} parent=43 // pred_region
          %v338 = vld [vmem:[#allocation4] sm:$0xff]
          %v339 = vld [vmem:[#allocation4 + $0x8] sm:$0xff]
          %v340 = vld [vmem:[#allocation4 + $0x10] sm:$0xff]
          %v341 = vld [vmem:[#allocation4 + $0x18] sm:$0xff]
          %v342 = vld [vmem:[#allocation4 + $0x20] sm:$0xff]
          %v343 = vld [vmem:[#allocation4 + $0x28] sm:$0xff]
          %v344 = vld [vmem:[#allocation4 + $0x30] sm:$0xff]
          %v345 = vld [vmem:[#allocation4 + $0x38] sm:$0xff]
          %v346 = vld [vmem:[#allocation4 + $0x40] sm:$0xff]
          %v347 = vld [vmem:[#allocation4 + $0x48] sm:$0xff]
          %v348 = vld [vmem:[#allocation4 + $0x50] sm:$0xff]
          %v349 = vld [vmem:[#allocation4 + $0x58] sm:$0xff]
          %v350 = vld [vmem:[#allocation4 + $0x60] sm:$0xff]
          %v351 = vld [vmem:[#allocation4 + $0x68] sm:$0xff]
          %v352 = vld [vmem:[#allocation4 + $0x70] sm:$0xff]
          %v353 = vld [vmem:[#allocation4 + $0x78] sm:$0xff]
          %v354 = vld [vmem:[#allocation9] sm:$0xff]
          %v355 = vld [vmem:[#allocation9 + $0x8] sm:$0xff]
          %v356 = vld [vmem:[#allocation9 + $0x10] sm:$0xff]
          %v357 = vld [vmem:[#allocation9 + $0x18] sm:$0xff]
          %v358 = vld [vmem:[#allocation9 + $0x20] sm:$0xff]
          %v359 = vld [vmem:[#allocation9 + $0x28] sm:$0xff]
          %v360 = vld [vmem:[#allocation9 + $0x30] sm:$0xff]
          %v361 = vld [vmem:[#allocation9 + $0x38] sm:$0xff]
          %v362 = vld [vmem:[#allocation9 + $0x40] sm:$0xff]
          %v363 = vld [vmem:[#allocation9 + $0x48] sm:$0xff]
          %v364 = vld [vmem:[#allocation9 + $0x50] sm:$0xff]
          %v365 = vld [vmem:[#allocation9 + $0x58] sm:$0xff]
          %v366 = vld [vmem:[#allocation9 + $0x60] sm:$0xff]
          %v367 = vld [vmem:[#allocation9 + $0x68] sm:$0xff]
          %v368 = vld [vmem:[#allocation9 + $0x70] sm:$0xff]
          %v369 = vld [vmem:[#allocation9 + $0x78] sm:$0xff]
          %v370 = vld [vmem:[#allocation10] sm:$0x1]
          %v372 = vlaneseq
          %v373 = vshrl.u32 %v372, 7
          %v374 = vsub.s32 0, %v373
          %v375 = vrot.slane %v370, %v374
          %377 = vmatprep.subr.mxu0 0.0
          %378 = vmatpush1.msra.mxu0 %v354
          %379 = vmatprep.subr.mxu0 0.0
          %380 = vmatpush1.msra.mxu0 %v355
          %381 = vmatprep.subr.mxu0 0.0
          %382 = vmatpush1.msra.mxu0 %v356
          %383 = vmatprep.subr.mxu0 0.0
          %384 = vmatpush1.msra.mxu0 %v357
          %385 = vmatprep.subr.mxu0 0.0
          %386 = vmatpush1.msra.mxu0 %v358
          %387 = vmatprep.subr.mxu0 0.0
          %388 = vmatpush1.msra.mxu0 %v359
          %389 = vmatprep.subr.mxu0 0.0
          %390 = vmatpush1.msra.mxu0 %v360
          %391 = vmatprep.subr.mxu0 0.0
          %392 = vmatpush1.msra.mxu0 %v361
          %393 = vmatprep.subr.mxu0 0.0
          %394 = vmatpush1.msra.mxu0 %v362
          %395 = vmatprep.subr.mxu0 0.0
          %396 = vmatpush1.msra.mxu0 %v363
          %397 = vmatprep.subr.mxu0 0.0
          %398 = vmatpush1.msra.mxu0 %v364
          %399 = vmatprep.subr.mxu0 0.0
          %400 = vmatpush1.msra.mxu0 %v365
          %401 = vmatprep.subr.mxu0 0.0
          %402 = vmatpush1.msra.mxu0 %v366
          %403 = vmatprep.subr.mxu0 0.0
          %404 = vmatpush1.msra.mxu0 %v367
          %405 = vmatprep.subr.mxu0 0.0
          %406 = vmatpush1.msra.mxu0 %v368
          %407 = vmatprep.subr.mxu0 0.0
          %408 = vmatpush1.msra.mxu0 %v369
          %409 = vmatprep.subr.mxu0 0.0
          %410 = vmatpush1.msra.mxu0 0.0
          %411 = vmatprep.subr.mxu0 0.0
          %412 = vmatpush1.msra.mxu0 0.0
          %413 = vmatprep.subr.mxu0 0.0
          %414 = vmatpush1.msra.mxu0 0.0
          %415 = vmatprep.subr.mxu0 0.0
          %416 = vmatpush1.msra.mxu0 0.0
          %417 = vmatprep.subr.mxu0 0.0
          %418 = vmatpush1.msra.mxu0 0.0
          %419 = vmatprep.subr.mxu0 0.0
          %420 = vmatpush1.msra.mxu0 0.0
          %421 = vmatprep.subr.mxu0 0.0
          %422 = vmatpush1.msra.mxu0 0.0
          %423 = vmatprep.subr.mxu0 0.0
          %424 = vmatpush1.msra.mxu0 0.0
          %425 = vmatprep.subr.mxu0 0.0
          %426 = vmatpush1.msra.mxu0 0.0
          %427 = vmatprep.subr.mxu0 0.0
          %428 = vmatpush1.msra.mxu0 0.0
          %429 = vmatprep.subr.mxu0 0.0
          %430 = vmatpush1.msra.mxu0 0.0
          %431 = vmatprep.subr.mxu0 0.0
          %432 = vmatpush1.msra.mxu0 0.0
          %433 = vmatprep.subr.mxu0 0.0
          %434 = vmatpush1.msra.mxu0 0.0
          %435 = vmatprep.subr.mxu0 0.0
          %436 = vmatpush1.msra.mxu0 0.0
          %437 = vmatprep.subr.mxu0 0.0
          %438 = vmatpush1.msra.mxu0 0.0
          %439 = vmatprep.subr.mxu0 0.0
          %440 = vmatpush1.msra.mxu0 0.0
          %441 = vmatprep.mubr.f32.mxu0 0.0
          %442 = vmatmul.mubr.f32.gmra.mrb[0].mxu0 %v338
          %v443 = vpop.f32.mrb[0].mxu0
          %v444 = vadd.f32 %v375, %v443
          %v445 = vpop.f32.mrb[0].mxu0
          %446 = vmatprep.mubr.f32.mxu0 0.0
          %447 = vmatmul.mubr.f32.gmra.mrb[0].mxu0 %v339
          %v448 = vpop.f32.mrb[0].mxu0
          %v449 = vadd.f32 %v375, %v448
          %v450 = vpop.f32.mrb[0].mxu0
          %451 = vmatprep.mubr.f32.mxu0 0.0
          %452 = vmatmul.mubr.f32.gmra.mrb[0].mxu0 %v340
          %v453 = vpop.f32.mrb[0].mxu0
          %v454 = vadd.f32 %v375, %v453
          %v455 = vpop.f32.mrb[0].mxu0
          %456 = vmatprep.mubr.f32.mxu0 0.0
          %457 = vmatmul.mubr.f32.gmra.mrb[0].mxu0 %v341
          %v458 = vpop.f32.mrb[0].mxu0
          %v459 = vadd.f32 %v375, %v458
          %v460 = vpop.f32.mrb[0].mxu0
          %461 = vmatprep.mubr.f32.mxu0 0.0
          %462 = vmatmul.mubr.f32.gmra.mrb[0].mxu0 %v342
          %v463 = vpop.f32.mrb[0].mxu0
          %v464 = vadd.f32 %v375, %v463
          %v465 = vpop.f32.mrb[0].mxu0
          %466 = vmatprep.mubr.f32.mxu0 0.0
          %467 = vmatmul.mubr.f32.gmra.mrb[0].mxu0 %v343
          %v468 = vpop.f32.mrb[0].mxu0
          %v469 = vadd.f32 %v375, %v468
          %v470 = vpop.f32.mrb[0].mxu0
          %471 = vmatprep.mubr.f32.mxu0 0.0
          %472 = vmatmul.mubr.f32.gmra.mrb[0].mxu0 %v344
          %v473 = vpop.f32.mrb[0].mxu0
          %v474 = vadd.f32 %v375, %v473
          %v475 = vpop.f32.mrb[0].mxu0
          %476 = vmatprep.mubr.f32.mxu0 0.0
          %477 = vmatmul.mubr.f32.gmra.mrb[0].mxu0 %v345
          %v478 = vpop.f32.mrb[0].mxu0
          %v479 = vadd.f32 %v375, %v478
          %v480 = vpop.f32.mrb[0].mxu0
          %481 = vmatprep.mubr.f32.mxu0 0.0
          %482 = vmatmul.mubr.f32.gmra.mrb[0].mxu0 %v346
          %v483 = vpop.f32.mrb[0].mxu0
          %v484 = vadd.f32 %v375, %v483
          %v485 = vpop.f32.mrb[0].mxu0
          %486 = vmatprep.mubr.f32.mxu0 0.0
          %487 = vmatmul.mubr.f32.gmra.mrb[0].mxu0 %v347
          %v488 = vpop.f32.mrb[0].mxu0
          %v489 = vadd.f32 %v375, %v488
          %v490 = vpop.f32.mrb[0].mxu0
          %491 = vmatprep.mubr.f32.mxu0 0.0
          %492 = vmatmul.mubr.f32.gmra.mrb[0].mxu0 %v348
          %v493 = vpop.f32.mrb[0].mxu0
          %v494 = vadd.f32 %v375, %v493
          %v495 = vpop.f32.mrb[0].mxu0
          %496 = vmatprep.mubr.f32.mxu0 0.0
          %497 = vmatmul.mubr.f32.gmra.mrb[0].mxu0 %v349
          %v498 = vpop.f32.mrb[0].mxu0
          %v499 = vadd.f32 %v375, %v498
          %v500 = vpop.f32.mrb[0].mxu0
          %501 = vmatprep.mubr.f32.mxu0 0.0
          %502 = vmatmul.mubr.f32.gmra.mrb[0].mxu0 %v350
          %v503 = vpop.f32.mrb[0].mxu0
          %v504 = vadd.f32 %v375, %v503
          %v505 = vpop.f32.mrb[0].mxu0
          %506 = vmatprep.mubr.f32.mxu0 0.0
          %507 = vmatmul.mubr.f32.gmra.mrb[0].mxu0 %v351
          %v508 = vpop.f32.mrb[0].mxu0
          %v509 = vadd.f32 %v375, %v508
          %v510 = vpop.f32.mrb[0].mxu0
          %511 = vmatprep.mubr.f32.mxu0 0.0
          %512 = vmatmul.mubr.f32.gmra.mrb[0].mxu0 %v352
          %v513 = vpop.f32.mrb[0].mxu0
          %v514 = vadd.f32 %v375, %v513
          %v515 = vpop.f32.mrb[0].mxu0
          %516 = vmatprep.mubr.f32.mxu0 0.0
          %517 = vmatmul.mubr.f32.gmra.mrb[0].mxu0 %v353
          %v518 = vpop.f32.mrb[0].mxu0
          %v519 = vadd.f32 %v375, %v518
          %v520 = vpop.f32.mrb[0].mxu0
          %521 = vdwg.mxu0
          %v522 = vmax.f32 %v444, 0.0
          %v523 = vmax.f32 %v449, 0.0
          %v524 = vmax.f32 %v454, 0.0
          %v525 = vmax.f32 %v459, 0.0
          %v526 = vmax.f32 %v464, 0.0
          %v527 = vmax.f32 %v469, 0.0
          %v528 = vmax.f32 %v474, 0.0
          %v529 = vmax.f32 %v479, 0.0
          %v530 = vmax.f32 %v484, 0.0
          %v531 = vmax.f32 %v489, 0.0
          %v532 = vmax.f32 %v494, 0.0
          %v533 = vmax.f32 %v499, 0.0
          %v534 = vmax.f32 %v504, 0.0
          %v535 = vmax.f32 %v509, 0.0
          %v536 = vmax.f32 %v514, 0.0
          %v537 = vmax.f32 %v519, 0.0
          %v538 = vld [vmem:[#allocation12] sm:$0xff]
          %v539 = vld [vmem:[#allocation12 + $0x8] sm:$0xff]
          %v540 = vld [vmem:[#allocation12 + $0x10] sm:$0xff]
          %v541 = vld [vmem:[#allocation12 + $0x18] sm:$0xff]
          %v542 = vld [vmem:[#allocation12 + $0x20] sm:$0xff]
          %v543 = vld [vmem:[#allocation12 + $0x28] sm:$0xff]
          %v544 = vld [vmem:[#allocation12 + $0x30] sm:$0xff]
          %v545 = vld [vmem:[#allocation12 + $0x38] sm:$0xff]
          %v546 = vld [vmem:[#allocation12 + $0x40] sm:$0xff]
          %v547 = vld [vmem:[#allocation12 + $0x48] sm:$0xff]
          %v548 = vld [vmem:[#allocation12 + $0x50] sm:$0xff]
          %v549 = vld [vmem:[#allocation12 + $0x58] sm:$0xff]
          %v550 = vld [vmem:[#allocation12 + $0x60] sm:$0xff]
          %v551 = vld [vmem:[#allocation12 + $0x68] sm:$0xff]
          %v552 = vld [vmem:[#allocation12 + $0x70] sm:$0xff]
          %v553 = vld [vmem:[#allocation12 + $0x78] sm:$0xff]
          %v554 = vld [vmem:[#allocation13] sm:$0x1]
          %v556 = vlaneseq
          %v557 = vshrl.u32 %v556, 7
          %v558 = vsub.s32 0, %v557
          %v559 = vrot.slane %v554, %v558
          %561 = vmatprep.subr.mxu0 0.0
          %562 = vmatpush1.msra.mxu0 %v538
          %563 = vmatprep.subr.mxu0 0.0
          %564 = vmatpush1.msra.mxu0 %v539
          %565 = vmatprep.subr.mxu0 0.0
          %566 = vmatpush1.msra.mxu0 %v540
          %567 = vmatprep.subr.mxu0 0.0
          %568 = vmatpush1.msra.mxu0 %v541
          %569 = vmatprep.subr.mxu0 0.0
          %570 = vmatpush1.msra.mxu0 %v542
          %571 = vmatprep.subr.mxu0 0.0
          %572 = vmatpush1.msra.mxu0 %v543
          %573 = vmatprep.subr.mxu0 0.0
          %574 = vmatpush1.msra.mxu0 %v544
          %575 = vmatprep.subr.mxu0 0.0
          %576 = vmatpush1.msra.mxu0 %v545
          %577 = vmatprep.subr.mxu0 0.0
          %578 = vmatpush1.msra.mxu0 %v546
          %579 = vmatprep.subr.mxu0 0.0
          %580 = vmatpush1.msra.mxu0 %v547
          %581 = vmatprep.subr.mxu0 0.0
          %582 = vmatpush1.msra.mxu0 %v548
          %583 = vmatprep.subr.mxu0 0.0
          %584 = vmatpush1.msra.mxu0 %v549
          %585 = vmatprep.subr.mxu0 0.0
          %586 = vmatpush1.msra.mxu0 %v550
          %587 = vmatprep.subr.mxu0 0.0
          %588 = vmatpush1.msra.mxu0 %v551
          %589 = vmatprep.subr.mxu0 0.0
          %590 = vmatpush1.msra.mxu0 %v552
          %591 = vmatprep.subr.mxu0 0.0
          %592 = vmatpush1.msra.mxu0 %v553
          %593 = vmatprep.subr.mxu0 0.0
          %594 = vmatpush1.msra.mxu0 0.0
          %595 = vmatprep.subr.mxu0 0.0
          %596 = vmatpush1.msra.mxu0 0.0
          %597 = vmatprep.subr.mxu0 0.0
          %598 = vmatpush1.msra.mxu0 0.0
          %599 = vmatprep.subr.mxu0 0.0
          %600 = vmatpush1.msra.mxu0 0.0
          %601 = vmatprep.subr.mxu0 0.0
          %602 = vmatpush1.msra.mxu0 0.0
          %603 = vmatprep.subr.mxu0 0.0
          %604 = vmatpush1.msra.mxu0 0.0
          %605 = vmatprep.subr.mxu0 0.0
          %606 = vmatpush1.msra.mxu0 0.0
          %607 = vmatprep.subr.mxu0 0.0
          %608 = vmatpush1.msra.mxu0 0.0
          %609 = vmatprep.subr.mxu0 0.0
          %610 = vmatpush1.msra.mxu0 0.0
          %611 = vmatprep.subr.mxu0 0.0
          %612 = vmatpush1.msra.mxu0 0.0
          %613 = vmatprep.subr.mxu0 0.0
          %614 = vmatpush1.msra.mxu0 0.0
          %615 = vmatprep.subr.mxu0 0.0
          %616 = vmatpush1.msra.mxu0 0.0
          %617 = vmatprep.subr.mxu0 0.0
          %618 = vmatpush1.msra.mxu0 0.0
          %619 = vmatprep.subr.mxu0 0.0
          %620 = vmatpush1.msra.mxu0 0.0
          %621 = vmatprep.subr.mxu0 0.0
          %622 = vmatpush1.msra.mxu0 0.0
          %623 = vmatprep.subr.mxu0 0.0
          %624 = vmatpush1.msra.mxu0 0.0
          %625 = vmatprep.mubr.f32.mxu0 0.0
          %626 = vmatmul.mubr.f32.gmra.mrb[0].mxu0 %v522
          %v627 = vpop.f32.mrb[0].mxu0
          %v628 = vadd.f32 %v559, %v627
          %v629 = vpop.f32.mrb[0].mxu0
          %630 = vmatprep.mubr.f32.mxu0 0.0
          %631 = vmatmul.mubr.f32.gmra.mrb[0].mxu0 %v523
          %v632 = vpop.f32.mrb[0].mxu0
          %v633 = vadd.f32 %v559, %v632
          %v634 = vpop.f32.mrb[0].mxu0
          %635 = vmatprep.mubr.f32.mxu0 0.0
          %636 = vmatmul.mubr.f32.gmra.mrb[0].mxu0 %v524
          %v637 = vpop.f32.mrb[0].mxu0
          %v638 = vadd.f32 %v559, %v637
          %v639 = vpop.f32.mrb[0].mxu0
          %640 = vmatprep.mubr.f32.mxu0 0.0
          %641 = vmatmul.mubr.f32.gmra.mrb[0].mxu0 %v525
          %v642 = vpop.f32.mrb[0].mxu0
          %v643 = vadd.f32 %v559, %v642
          %v644 = vpop.f32.mrb[0].mxu0
          %645 = vmatprep.mubr.f32.mxu0 0.0
          %646 = vmatmul.mubr.f32.gmra.mrb[0].mxu0 %v526
          %v647 = vpop.f32.mrb[0].mxu0
          %v648 = vadd.f32 %v559, %v647
          %v649 = vpop.f32.mrb[0].mxu0
          %650 = vmatprep.mubr.f32.mxu0 0.0
          %651 = vmatmul.mubr.f32.gmra.mrb[0].mxu0 %v527
          %v652 = vpop.f32.mrb[0].mxu0
          %v653 = vadd.f32 %v559, %v652
          %v654 = vpop.f32.mrb[0].mxu0
          %655 = vmatprep.mubr.f32.mxu0 0.0
          %656 = vmatmul.mubr.f32.gmra.mrb[0].mxu0 %v528
          %v657 = vpop.f32.mrb[0].mxu0
          %v658 = vadd.f32 %v559, %v657
          %v659 = vpop.f32.mrb[0].mxu0
          %660 = vmatprep.mubr.f32.mxu0 0.0
          %661 = vmatmul.mubr.f32.gmra.mrb[0].mxu0 %v529
          %v662 = vpop.f32.mrb[0].mxu0
          %v663 = vadd.f32 %v559, %v662
          %v664 = vpop.f32.mrb[0].mxu0
          %665 = vmatprep.mubr.f32.mxu0 0.0
          %666 = vmatmul.mubr.f32.gmra.mrb[0].mxu0 %v530
          %v667 = vpop.f32.mrb[0].mxu0
          %v668 = vadd.f32 %v559, %v667
          %v669 = vpop.f32.mrb[0].mxu0
          %670 = vmatprep.mubr.f32.mxu0 0.0
          %671 = vmatmul.mubr.f32.gmra.mrb[0].mxu0 %v531
          %v672 = vpop.f32.mrb[0].mxu0
          %v673 = vadd.f32 %v559, %v672
          %v674 = vpop.f32.mrb[0].mxu0
          %675 = vmatprep.mubr.f32.mxu0 0.0
          %676 = vmatmul.mubr.f32.gmra.mrb[0].mxu0 %v532
          %v677 = vpop.f32.mrb[0].mxu0
          %v678 = vadd.f32 %v559, %v677
          %v679 = vpop.f32.mrb[0].mxu0
          %680 = vmatprep.mubr.f32.mxu0 0.0
          %681 = vmatmul.mubr.f32.gmra.mrb[0].mxu0 %v533
          %v682 = vpop.f32.mrb[0].mxu0
          %v683 = vadd.f32 %v559, %v682
          %v684 = vpop.f32.mrb[0].mxu0
          %685 = vmatprep.mubr.f32.mxu0 0.0
          %686 = vmatmul.mubr.f32.gmra.mrb[0].mxu0 %v534
          %v687 = vpop.f32.mrb[0].mxu0
          %v688 = vadd.f32 %v559, %v687
          %v689 = vpop.f32.mrb[0].mxu0
          %690 = vmatprep.mubr.f32.mxu0 0.0
          %691 = vmatmul.mubr.f32.gmra.mrb[0].mxu0 %v535
          %v692 = vpop.f32.mrb[0].mxu0
          %v693 = vadd.f32 %v559, %v692
          %v694 = vpop.f32.mrb[0].mxu0
          %695 = vmatprep.mubr.f32.mxu0 0.0
          %696 = vmatmul.mubr.f32.gmra.mrb[0].mxu0 %v536
          %v697 = vpop.f32.mrb[0].mxu0
          %v698 = vadd.f32 %v559, %v697
          %v699 = vpop.f32.mrb[0].mxu0
          %700 = vmatprep.mubr.f32.mxu0 0.0
          %701 = vmatmul.mubr.f32.gmra.mrb[0].mxu0 %v537
          %v702 = vpop.f32.mrb[0].mxu0
          %v703 = vadd.f32 %v559, %v702
          %v704 = vpop.f32.mrb[0].mxu0
          %705 = vdwg.mxu0
          %s706 = scalar_lea.vmem [#allocation3], %s333
          %707 = vst [vmem:[%s706] sm:$0xff] %v628
          %708 = vst [vmem:[%s706 + $0x8] sm:$0xff] %v633
          %709 = vst [vmem:[%s706 + $0x10] sm:$0xff] %v638
          %710 = vst [vmem:[%s706 + $0x18] sm:$0xff] %v643
          %711 = vst [vmem:[%s706 + $0x20] sm:$0xff] %v648
          %712 = vst [vmem:[%s706 + $0x28] sm:$0xff] %v653
          %713 = vst [vmem:[%s706 + $0x30] sm:$0xff] %v658
          %714 = vst [vmem:[%s706 + $0x38] sm:$0xff] %v663
          %715 = vst [vmem:[%s706 + $0x40] sm:$0xff] %v668
          %716 = vst [vmem:[%s706 + $0x48] sm:$0xff] %v673
          %717 = vst [vmem:[%s706 + $0x50] sm:$0xff] %v678
          %718 = vst [vmem:[%s706 + $0x58] sm:$0xff] %v683
          %719 = vst [vmem:[%s706 + $0x60] sm:$0xff] %v688
          %720 = vst [vmem:[%s706 + $0x68] sm:$0xff] %v693
          %721 = vst [vmem:[%s706 + $0x70] sm:$0xff] %v698
          %722 = vst [vmem:[%s706 + $0x78] sm:$0xff] %v703
          %v723 = vmul.f32 %v628, 0.1
          %v724 = vmul.f32 %v633, 0.1
          %v725 = vmul.f32 %v638, 0.1
          %v726 = vmul.f32 %v643, 0.1
          %v727 = vmul.f32 %v648, 0.1
          %v728 = vmul.f32 %v653, 0.1
          %v729 = vmul.f32 %v658, 0.1
          %v730 = vmul.f32 %v663, 0.1
          %v731 = vmul.f32 %v668, 0.1
          %v732 = vmul.f32 %v673, 0.1
          %v733 = vmul.f32 %v678, 0.1
          %v734 = vmul.f32 %v683, 0.1
          %v735 = vmul.f32 %v688, 0.1
          %v736 = vmul.f32 %v693, 0.1
          %v737 = vmul.f32 %v698, 0.1
          %v738 = vmul.f32 %v703, 0.1
          %s739 = scalar_lea.vmem [#allocation2], %s333
          %740 = vst [vmem:[%s739] sm:$0xff] %v723
          %741 = vst [vmem:[%s739 + $0x8] sm:$0xff] %v724
          %742 = vst [vmem:[%s739 + $0x10] sm:$0xff] %v725
          %743 = vst [vmem:[%s739 + $0x18] sm:$0xff] %v726
          %744 = vst [vmem:[%s739 + $0x20] sm:$0xff] %v727
          %745 = vst [vmem:[%s739 + $0x28] sm:$0xff] %v728
          %746 = vst [vmem:[%s739 + $0x30] sm:$0xff] %v729
          %747 = vst [vmem:[%s739 + $0x38] sm:$0xff] %v730
          %748 = vst [vmem:[%s739 + $0x40] sm:$0xff] %v731
          %749 = vst [vmem:[%s739 + $0x48] sm:$0xff] %v732
          %750 = vst [vmem:[%s739 + $0x50] sm:$0xff] %v733
          %751 = vst [vmem:[%s739 + $0x58] sm:$0xff] %v734
          %752 = vst [vmem:[%s739 + $0x60] sm:$0xff] %v735
          %753 = vst [vmem:[%s739 + $0x68] sm:$0xff] %v736
          %754 = vst [vmem:[%s739 + $0x70] sm:$0xff] %v737
          %755 = vst [vmem:[%s739 + $0x78] sm:$0xff] %v738
        $region72: #{tpu_custom_call.1} parent=43 // pred_fallthru
          _
        %p756 = scmp.gt.s32.totalorder %s26, 0
        // Predicated region
        $region73: #{tpu_custom_call.1} parent=43 // pred_check
          %p757 = pneg %p756
        $region74: #{tpu_custom_call.1} parent=43 // pred_check_branch
          %759 = sbr.rel (%p757) target = $region76
        $region75: #{tpu_custom_call.1} parent=43 // pred_region
          %s760 = ssub.s32 %s26, 1
          %p761 = scmp.lt.s32.totalorder %s760, 0
          %s762 = ssub.s32 0, %s760
          %s763 = scalar_select %p761, %s762, %s760
          %s764 = sand.u32 %s763, 1
          %s765 = ssub.s32 0, %s764
          %s766 = scalar_select %p761, %s765, %s764
          %p767 = scmp.ne.s32.totalorder %s766, 0
          %p768 = scmp.lt.s32.totalorder %s766, 0
          %p769 = pnand %p768, %p767
          %p770 = pneg %p769
          %s771 = sadd.s32 %s766, 2
          %s772 = scalar_select %p770, %s771, %s766
          %s773 = ssub.s32 1, %s772
          %s774 = smul.u32 %s772, 128
          %s775 = smul.u32 %s773, 128
          %s776 = sadd.s32 %s775, %s333
          %s777 = scalar_lea.vmem [#allocation3], %s774
          %v778 = vld [vmem:[%s777] sm:$0xff]
          %v779 = vld [vmem:[%s777 + $0x8] sm:$0xff]
          %v780 = vld [vmem:[%s777 + $0x10] sm:$0xff]
          %v781 = vld [vmem:[%s777 + $0x18] sm:$0xff]
          %v782 = vld [vmem:[%s777 + $0x20] sm:$0xff]
          %v783 = vld [vmem:[%s777 + $0x28] sm:$0xff]
          %v784 = vld [vmem:[%s777 + $0x30] sm:$0xff]
          %v785 = vld [vmem:[%s777 + $0x38] sm:$0xff]
          %v786 = vld [vmem:[%s777 + $0x40] sm:$0xff]
          %v787 = vld [vmem:[%s777 + $0x48] sm:$0xff]
          %v788 = vld [vmem:[%s777 + $0x50] sm:$0xff]
          %v789 = vld [vmem:[%s777 + $0x58] sm:$0xff]
          %v790 = vld [vmem:[%s777 + $0x60] sm:$0xff]
          %v791 = vld [vmem:[%s777 + $0x68] sm:$0xff]
          %v792 = vld [vmem:[%s777 + $0x70] sm:$0xff]
          %v793 = vld [vmem:[%s777 + $0x78] sm:$0xff]
          %v794 = vld [vmem:[#allocation7] sm:$0xf]
          %v795 = vld [vmem:[#allocation7 + $0x4] sm:$0xf]
          %v796 = vld [vmem:[#allocation7 + $0x8] sm:$0xf]
          %v797 = vld [vmem:[#allocation7 + $0xc] sm:$0xf]
          %v798 = vld [vmem:[#allocation7 + $0x10] sm:$0xf]
          %v799 = vld [vmem:[#allocation7 + $0x14] sm:$0xf]
          %v800 = vld [vmem:[#allocation7 + $0x18] sm:$0xf]
          %v801 = vld [vmem:[#allocation7 + $0x1c] sm:$0xf]
          %v802 = vld [vmem:[#allocation7 + $0x20] sm:$0xf]
          %v803 = vld [vmem:[#allocation7 + $0x24] sm:$0xf]
          %v804 = vld [vmem:[#allocation7 + $0x28] sm:$0xf]
          %v805 = vld [vmem:[#allocation7 + $0x2c] sm:$0xf]
          %v806 = vld [vmem:[#allocation7 + $0x30] sm:$0xf]
          %v807 = vld [vmem:[#allocation7 + $0x34] sm:$0xf]
          %v808 = vld [vmem:[#allocation7 + $0x38] sm:$0xf]
          %v809 = vld [vmem:[#allocation7 + $0x3c] sm:$0xf]
          %v810 = vpack.c.bf16 %v779, %v778
          %v811 = vpack.c.bf16 %v781, %v780
          %v812 = vpack.c.bf16 %v783, %v782
          %v813 = vpack.c.bf16 %v785, %v784
          %v814 = vpack.c.bf16 %v787, %v786
          %v815 = vpack.c.bf16 %v789, %v788
          %v816 = vpack.c.bf16 %v791, %v790
          %v817 = vpack.c.bf16 %v793, %v792
          %v834 = vunpack.c.l.b16 %v794
          %v835 = vunpack.c.l.b16 %v795
          %v836 = vunpack.c.l.b16 %v796
          %v837 = vunpack.c.l.b16 %v797
          %v838 = vunpack.c.l.b16 %v798
          %v839 = vunpack.c.l.b16 %v799
          %v840 = vunpack.c.l.b16 %v800
          %v841 = vunpack.c.l.b16 %v801
          %v842 = vunpack.c.l.b16 %v802
          %v843 = vunpack.c.l.b16 %v803
          %v844 = vunpack.c.l.b16 %v804
          %v845 = vunpack.c.l.b16 %v805
          %v846 = vunpack.c.l.b16 %v806
          %v847 = vunpack.c.l.b16 %v807
          %v848 = vunpack.c.l.b16 %v808
          %v849 = vunpack.c.l.b16 %v809
          %v850 = vpack.c.b16 %v835, %v834
          %v851 = vpack.c.b16 %v837, %v836
          %v852 = vpack.c.b16 %v839, %v838
          %v853 = vpack.c.b16 %v841, %v840
          %v854 = vpack.c.b16 %v843, %v842
          %v855 = vpack.c.b16 %v845, %v844
          %v856 = vpack.c.b16 %v847, %v846
          %v857 = vpack.c.b16 %v849, %v848
          %866 = vmatprep.subr.bf16.mxu0 0
          %867 = vmatpush1.bf16.msra.mxu0 %v810
          %868 = vmatprep.subr.bf16.mxu0 0
          %869 = vmatpush1.bf16.msra.mxu0 %v811
          %870 = vmatprep.subr.bf16.mxu0 0
          %871 = vmatpush1.bf16.msra.mxu0 %v812
          %872 = vmatprep.subr.bf16.mxu0 0
          %873 = vmatpush1.bf16.msra.mxu0 %v813
          %874 = vmatprep.subr.bf16.mxu0 0
          %875 = vmatpush1.bf16.msra.mxu0 %v814
          %876 = vmatprep.subr.bf16.mxu0 0
          %877 = vmatpush1.bf16.msra.mxu0 %v815
          %878 = vmatprep.subr.bf16.mxu0 0
          %879 = vmatpush1.bf16.msra.mxu0 %v816
          %880 = vmatprep.subr.bf16.mxu0 0
          %881 = vmatpush1.bf16.msra.mxu0 %v817
          %882 = vmatprep.subr.bf16.mxu0 0
          %883 = vmatpush1.bf16.msra.mxu0 0
          %884 = vmatprep.subr.bf16.mxu0 0
          %885 = vmatpush1.bf16.msra.mxu0 0
          %886 = vmatprep.subr.bf16.mxu0 0
          %887 = vmatpush1.bf16.msra.mxu0 0
          %888 = vmatprep.subr.bf16.mxu0 0
          %889 = vmatpush1.bf16.msra.mxu0 0
          %890 = vmatprep.subr.bf16.mxu0 0
          %891 = vmatpush1.bf16.msra.mxu0 0
          %892 = vmatprep.subr.bf16.mxu0 0
          %893 = vmatpush1.bf16.msra.mxu0 0
          %894 = vmatprep.subr.bf16.mxu0 0
          %895 = vmatpush1.bf16.msra.mxu0 0
          %896 = vmatprep.subr.bf16.mxu0 0
          %897 = vmatpush1.bf16.msra.mxu0 0
          %898 = vmatprep.mubr.bf16.mxu0 0
          %899 = vmatmul.mubr.bf16.gmra.mrb[0].mxu0 %v850
          %v900 = vpop.f32.mrb[0].mxu0
          %v901 = vadd.f32 0.0, %v900
          %v902 = vpop.f32.mrb[0].mxu0
          %v903 = vpop.f32.mrb[0].mxu0
          %v904 = vadd.f32 0.0, %v903
          %v905 = vpop.f32.mrb[0].mxu0
          %906 = vmatprep.mubr.bf16.mxu0 0
          %907 = vmatmul.mubr.bf16.gmra.mrb[0].mxu0 %v851
          %v908 = vpop.f32.mrb[0].mxu0
          %v909 = vadd.f32 0.0, %v908
          %v910 = vpop.f32.mrb[0].mxu0
          %v911 = vpop.f32.mrb[0].mxu0
          %v912 = vadd.f32 0.0, %v911
          %v913 = vpop.f32.mrb[0].mxu0
          %914 = vmatprep.mubr.bf16.mxu0 0
          %915 = vmatmul.mubr.bf16.gmra.mrb[0].mxu0 %v852
          %v916 = vpop.f32.mrb[0].mxu0
          %v917 = vadd.f32 0.0, %v916
          %v918 = vpop.f32.mrb[0].mxu0
          %v919 = vpop.f32.mrb[0].mxu0
          %v920 = vadd.f32 0.0, %v919
          %v921 = vpop.f32.mrb[0].mxu0
          %922 = vmatprep.mubr.bf16.mxu0 0
          %923 = vmatmul.mubr.bf16.gmra.mrb[0].mxu0 %v853
          %v924 = vpop.f32.mrb[0].mxu0
          %v925 = vadd.f32 0.0, %v924
          %v926 = vpop.f32.mrb[0].mxu0
          %v927 = vpop.f32.mrb[0].mxu0
          %v928 = vadd.f32 0.0, %v927
          %v929 = vpop.f32.mrb[0].mxu0
          %930 = vmatprep.mubr.bf16.mxu0 0
          %931 = vmatmul.mubr.bf16.gmra.mrb[0].mxu0 %v854
          %v932 = vpop.f32.mrb[0].mxu0
          %v933 = vadd.f32 0.0, %v932
          %v934 = vpop.f32.mrb[0].mxu0
          %v935 = vpop.f32.mrb[0].mxu0
          %v936 = vadd.f32 0.0, %v935
          %v937 = vpop.f32.mrb[0].mxu0
          %938 = vmatprep.mubr.bf16.mxu0 0
          %939 = vmatmul.mubr.bf16.gmra.mrb[0].mxu0 %v855
          %v940 = vpop.f32.mrb[0].mxu0
          %v941 = vadd.f32 0.0, %v940
          %v942 = vpop.f32.mrb[0].mxu0
          %v943 = vpop.f32.mrb[0].mxu0
          %v944 = vadd.f32 0.0, %v943
          %v945 = vpop.f32.mrb[0].mxu0
          %946 = vmatprep.mubr.bf16.mxu0 0
          %947 = vmatmul.mubr.bf16.gmra.mrb[0].mxu0 %v856
          %v948 = vpop.f32.mrb[0].mxu0
          %v949 = vadd.f32 0.0, %v948
          %v950 = vpop.f32.mrb[0].mxu0
          %v951 = vpop.f32.mrb[0].mxu0
          %v952 = vadd.f32 0.0, %v951
          %v953 = vpop.f32.mrb[0].mxu0
          %954 = vmatprep.mubr.bf16.mxu0 0
          %955 = vmatmul.mubr.bf16.gmra.mrb[0].mxu0 %v857
          %v956 = vpop.f32.mrb[0].mxu0
          %v957 = vadd.f32 0.0, %v956
          %v958 = vpop.f32.mrb[0].mxu0
          %v959 = vpop.f32.mrb[0].mxu0
          %v960 = vadd.f32 0.0, %v959
          %v961 = vpop.f32.mrb[0].mxu0
          %962 = vdwg.mxu0
          %v963 = vmul.f32 %v901, 0.9
          %v964 = vmul.f32 %v904, 0.9
          %v965 = vmul.f32 %v909, 0.9
          %v966 = vmul.f32 %v912, 0.9
          %v967 = vmul.f32 %v917, 0.9
          %v968 = vmul.f32 %v920, 0.9
          %v969 = vmul.f32 %v925, 0.9
          %v970 = vmul.f32 %v928, 0.9
          %v971 = vmul.f32 %v933, 0.9
          %v972 = vmul.f32 %v936, 0.9
          %v973 = vmul.f32 %v941, 0.9
          %v974 = vmul.f32 %v944, 0.9
          %v975 = vmul.f32 %v949, 0.9
          %v976 = vmul.f32 %v952, 0.9
          %v977 = vmul.f32 %v957, 0.9
          %v978 = vmul.f32 %v960, 0.9
          %s979 = scalar_lea.vmem [#allocation2], %s333
          %v980 = vld [vmem:[%s979] sm:$0xff]
          %v981 = vld [vmem:[%s979 + $0x8] sm:$0xff]
          %v982 = vld [vmem:[%s979 + $0x10] sm:$0xff]
          %v983 = vld [vmem:[%s979 + $0x18] sm:$0xff]
          %v984 = vld [vmem:[%s979 + $0x20] sm:$0xff]
          %v985 = vld [vmem:[%s979 + $0x28] sm:$0xff]
          %v986 = vld [vmem:[%s979 + $0x30] sm:$0xff]
          %v987 = vld [vmem:[%s979 + $0x38] sm:$0xff]
          %v988 = vld [vmem:[%s979 + $0x40] sm:$0xff]
          %v989 = vld [vmem:[%s979 + $0x48] sm:$0xff]
          %v990 = vld [vmem:[%s979 + $0x50] sm:$0xff]
          %v991 = vld [vmem:[%s979 + $0x58] sm:$0xff]
          %v992 = vld [vmem:[%s979 + $0x60] sm:$0xff]
          %v993 = vld [vmem:[%s979 + $0x68] sm:$0xff]
          %v994 = vld [vmem:[%s979 + $0x70] sm:$0xff]
          %v995 = vld [vmem:[%s979 + $0x78] sm:$0xff]
          %v996 = vadd.f32 %v963, %v980
          %v997 = vadd.f32 %v964, %v981
          %v998 = vadd.f32 %v965, %v982
          %v999 = vadd.f32 %v966, %v983
          %v1000 = vadd.f32 %v967, %v984
          %v1001 = vadd.f32 %v968, %v985
          %v1002 = vadd.f32 %v969, %v986
          %v1003 = vadd.f32 %v970, %v987
          %v1004 = vadd.f32 %v971, %v988
          %v1005 = vadd.f32 %v972, %v989
          %v1006 = vadd.f32 %v973, %v990
          %v1007 = vadd.f32 %v974, %v991
          %v1008 = vadd.f32 %v975, %v992
          %v1009 = vadd.f32 %v976, %v993
          %v1010 = vadd.f32 %v977, %v994
          %v1011 = vadd.f32 %v978, %v995
          %p1012 = scmp.lt.s32.totalorder %s26, 10
          // Predicated region
          $region77: #{tpu_custom_call.1} parent=75 // pred_check
            %p1013 = pneg %p1012
          $region78: #{tpu_custom_call.1} parent=75 // pred_check_branch
            %1015 = sbr.rel (%p1013) target = $region80
          $region79: #{tpu_custom_call.1} parent=75 // pred_region
            %s1016 = scalar_lea.vmem [#allocation3], %s776
            %1017 = vst [vmem:[%s1016] sm:$0xff] %v996
            %1018 = vst [vmem:[%s1016 + $0x8] sm:$0xff] %v997
            %1019 = vst [vmem:[%s1016 + $0x10] sm:$0xff] %v998
            %1020 = vst [vmem:[%s1016 + $0x18] sm:$0xff] %v999
            %1021 = vst [vmem:[%s1016 + $0x20] sm:$0xff] %v1000
            %1022 = vst [vmem:[%s1016 + $0x28] sm:$0xff] %v1001
            %1023 = vst [vmem:[%s1016 + $0x30] sm:$0xff] %v1002
            %1024 = vst [vmem:[%s1016 + $0x38] sm:$0xff] %v1003
            %1025 = vst [vmem:[%s1016 + $0x40] sm:$0xff] %v1004
            %1026 = vst [vmem:[%s1016 + $0x48] sm:$0xff] %v1005
            %1027 = vst [vmem:[%s1016 + $0x50] sm:$0xff] %v1006
            %1028 = vst [vmem:[%s1016 + $0x58] sm:$0xff] %v1007
            %1029 = vst [vmem:[%s1016 + $0x60] sm:$0xff] %v1008
            %1030 = vst [vmem:[%s1016 + $0x68] sm:$0xff] %v1009
            %1031 = vst [vmem:[%s1016 + $0x70] sm:$0xff] %v1010
            %1032 = vst [vmem:[%s1016 + $0x78] sm:$0xff] %v1011
          $region80: #{tpu_custom_call.1} parent=75 // pred_fallthru
            _
          %p1033 = scmp.eq.s32.totalorder %s26, 10
          // Predicated region
          $region81: #{tpu_custom_call.1} parent=75 // pred_check
            %p1034 = pneg %p1033
          $region82: #{tpu_custom_call.1} parent=75 // pred_check_branch
            %1036 = sbr.rel (%p1034) target = $region84
          $region83: #{tpu_custom_call.1} parent=75 // pred_region
            %s1037 = scalar_lea.vmem [#allocation15], %s333
            %1038 = vst [vmem:[%s1037] sm:$0xff] %v996
            %1039 = vst [vmem:[%s1037 + $0x8] sm:$0xff] %v997
            %1040 = vst [vmem:[%s1037 + $0x10] sm:$0xff] %v998
            %1041 = vst [vmem:[%s1037 + $0x18] sm:$0xff] %v999
            %1042 = vst [vmem:[%s1037 + $0x20] sm:$0xff] %v1000
            %1043 = vst [vmem:[%s1037 + $0x28] sm:$0xff] %v1001
            %1044 = vst [vmem:[%s1037 + $0x30] sm:$0xff] %v1002
            %1045 = vst [vmem:[%s1037 + $0x38] sm:$0xff] %v1003
            %1046 = vst [vmem:[%s1037 + $0x40] sm:$0xff] %v1004
            %1047 = vst [vmem:[%s1037 + $0x48] sm:$0xff] %v1005
            %1048 = vst [vmem:[%s1037 + $0x50] sm:$0xff] %v1006
            %1049 = vst [vmem:[%s1037 + $0x58] sm:$0xff] %v1007
            %1050 = vst [vmem:[%s1037 + $0x60] sm:$0xff] %v1008
            %1051 = vst [vmem:[%s1037 + $0x68] sm:$0xff] %v1009
            %1052 = vst [vmem:[%s1037 + $0x70] sm:$0xff] %v1010
            %1053 = vst [vmem:[%s1037 + $0x78] sm:$0xff] %v1011
          $region84: #{tpu_custom_call.1} parent=75 // pred_fallthru
            _
        $region76: #{tpu_custom_call.1} parent=43 // pred_fallthru
          _
        // Predicated region
        $region85: #{tpu_custom_call.1} parent=43 // pred_check
          %p1054 = pneg %p183
        $region86: #{tpu_custom_call.1} parent=43 // pred_check_branch
          %1056 = sbr.rel (%p1054) target = $region88
        $region87: #{tpu_custom_call.1} parent=43 // pred_region
          %s1058 = ssub.s32 2048, 2048
          %1059 = vsyncadd [#allocation6], %s1058
          %s1060 = sshll.u32 [#allocation15], 4
          %s1061 = int_to_ptr.vmem [resolvable:$true] %s1060
          %1066 = dma.vmem_to_hbm [thread:$0]  %s1061, 2048, %s6, [#allocation6], 128, 128, 8
        $region88: #{tpu_custom_call.1} parent=43 // pred_fallthru
          _
        // Predicated region
        $region89: #{tpu_custom_call.1} parent=43 // pred_check
          %p1067 = pneg %p183
        $region90: #{tpu_custom_call.1} parent=43 // pred_check_branch
          %1069 = sbr.rel (%p1067) target = $region92
        $region91: #{tpu_custom_call.1} parent=43 // pred_region
          %1070 = dma.done [#allocation6], 2048
        $region92: #{tpu_custom_call.1} parent=43 // pred_fallthru
          _
      $region44: #{tpu_custom_call.1} parent=5 // pred_fallthru
        _
      %p1071 = scmp.le.s32.totalorder 2, %s17
      // Predicated region
      $region93: #{tpu_custom_call.1} parent=5 // pred_check
        %p1072 = pneg %p1071
      $region94: #{tpu_custom_call.1} parent=5 // pred_check_branch
        %1074 = sbr.rel (%p1072) target = $region96
      $region95: #{tpu_custom_call.1} parent=5 // pred_region
        %s1075 = ssub.s32 %s17, 2
      $region96: #{tpu_custom_call.1} parent=5 // pred_fallthru
        _
    $region6: #{tpu_custom_call.1} parent=1 // loop_footer
      %s21 = sadd.s32 1, %s17
    $region7: #{tpu_custom_call.1} parent=1 // loop_footer_branch
      %16 = sbr.rel target = $region3
    $region8: #{tpu_custom_call.1} parent=1 // loop_exit
      _
    %1076 = vsyncpa [#allocation5], 1
    %s1077 = scalar_lea.sflag [#allocation5], 1
    %1078 = vsyncpa %s1077, 1
    %1079 = vsyncpa [#allocation8], 1
    %1080 = vsyncpa [#allocation11], 1
    %1081 = vsyncpa [#allocation14], 1
    %1082 = vsyncpa [#allocation6], 1
    %s1083 = scalar_lea.sflag [#allocation6], 1
    %1084 = vsyncpa %s1083, 1

</llo_original>
